<compile_context>
chip_gen: v7x
topology: tpu7x:2x2x1
jax: 0.10.0
libtpu: 0.0.40
codegen_flags: <defaults>
</compile_context>

<pallas_src>
import jax
import jax.numpy as jnp
import numpy as np
from jax.experimental import pallas as pl
from jax.experimental.pallas import tpu as pltpu


def cross_network_kernel(x_ref, wt_ref, c_ref, t_ref, o_ref):
    """x_ref: (TB, D) VMEM; wt_ref: (D, L) VMEM; c_ref: (L,) SMEM; t_ref: (1, D) VMEM."""
    num_layers = wt_ref.shape[1]

    # One wide MXU matmul covers every layer's projection: A[:, i] = x0 @ w_i.
    a = jnp.dot(x_ref[...], wt_ref[...], preferred_element_type=jnp.float32)  # (TB, L)

    # Per-row scalar recurrence: s_{i+1} = s_i * (1 + A[:, i]) + c_i.
    # Each step is a (TB, 1) fma on a static lane slice of A -> negligible work,
    # so a static unroll is fine even for deep cross networks.
    s = jnp.ones((a.shape[0], 1), dtype=jnp.float32)
    for i in range(num_layers):
        s = s * (1.0 + a[:, i:i + 1]) + c_ref[i]

    # Single elementwise output pass: x_L = x0 * s_L + t_L.
    o_ref[...] = (x_ref[...].astype(jnp.float32) * s + t_ref[...]).astype(o_ref.dtype)


def _round_up(n, m):
    return ((n + m - 1) // m) * m


def cross_network(x, w_stack, wb_stack, b_stack, *,
                  target_block_bytes=2 * 1024 * 1024, batch_tile=None):
    """x: (B, D); w_stack: (L, D); wb_stack: (L, 1); b_stack: (L, D)."""
    B, D = x.shape
    L = w_stack.shape[0]
    if L == 0:
        return x

    w32 = w_stack.astype(jnp.float32)
    b32 = b_stack.astype(jnp.float32)
    wb32 = wb_stack.reshape(L).astype(jnp.float32)

    # Row-independent precompute (O(L*D) flops, negligible vs kernel HBM traffic):
    #   t_i = sum_{j<i} b_j,   c_i = t_i . w_i + wb_i,   t_L = sum_j b_j.
    b_cum = jnp.cumsum(b32, axis=0)                                        # (L, D)
    t_prefix = jnp.concatenate(
        [jnp.zeros((1, D), jnp.float32), b_cum[:-1]], axis=0)              # (L, D) = t_i
    c = jnp.sum(t_prefix * w32, axis=1) + wb32                             # (L,) scalars
    t_final = b_cum[-1][None, :]                                           # (1, D)
    wt = w32.T                                                             # (D, L) MXU RHS

    # Batch tile: target ~2 MiB blocks, cap 4 MiB so 2 buffers x (in + out)
    # <= 16 MiB resident VMEM on every generation; sublane-aligned rows.
    itemsize = jnp.dtype(x.dtype).itemsize
    sub = 8 if itemsize >= 4 else 16            # bf16 would need 16-row packing
    row_bytes = D * itemsize
    if batch_tile is not None:
        tb = _round_up(max(int(batch_tile), sub), sub)
    else:
        tb = target_block_bytes // row_bytes
        tb = max(min(tb, 8192), 512)            # amortize ~0.35 us/step overhead
        tb = min(tb, max(8, (4 * 1024 * 1024) // row_bytes))
        tb = _round_up(max(tb, sub), sub)
    tb = min(tb, _round_up(B, sub))
    # Keep >= 2 grid steps on large batches so v7x's second TensorCore has work.
    if B >= 4096 and pl.cdiv(B, tb) < 2:
        tb = _round_up(pl.cdiv(_round_up(B, sub), 2), sub)

    grid = (pl.cdiv(B, tb),)

    grid_spec = pltpu.PrefetchScalarGridSpec(
        num_scalar_prefetch=0,
        grid=grid,
        in_specs=[
            pl.BlockSpec((tb, D), lambda i: (i, 0)),             # x tile (partial last block OK)
            pl.BlockSpec((D, L), lambda i: (0, 0)),              # W^T, resident across tiles
            pl.BlockSpec(memory_space=pltpu.MemorySpace.SMEM),   # per-layer scalars c_i
            pl.BlockSpec((1, D), lambda i: (0, 0)),              # t_L
        ],
        out_specs=pl.BlockSpec((tb, D), lambda i: (i, 0)),
    )

    return pl.pallas_call(
        cross_network_kernel,
        out_shape=jax.ShapeDtypeStruct((B, D), x.dtype),
        grid_spec=grid_spec,
        compiler_params=pltpu.CompilerParams(
            dimension_semantics=("parallel",),   # batch tiles are independent
            vmem_limit_bytes=32 * 1024 * 1024,   # >= 2x worst-case resident; lifts v5e's 16 MiB default
        ),
    )(x, wt, c, t_final)


def cross_network_ref(x, w_stack, wb_stack, b_stack):
    """Pure-JAX reference mirroring the PyTorch forward exactly (literal recurrence)."""
    x0 = x
    for i in range(w_stack.shape[0]):
        xw = x @ w_stack[i][:, None] + wb_stack[i, 0]   # (B, 1)
        x = x0 * xw + b_stack[i][None, :] + x
    return x


if __name__ == "__main__":
    B, D, L = 20, 32, 3   # batch, concat_embed_dim, num_layers

    key = jax.random.PRNGKey(0)
    kx, kw, kwb, kb = jax.random.split(key, 4)

    x = jax.random.normal(kx, (B, D), dtype=jnp.float32)

    # nn.Linear(dim, 1): weight ~ U(-1/sqrt(dim), 1/sqrt(dim)), bias likewise.
    bound = 1.0 / np.sqrt(D)
    w_stack = jax.random.uniform(kw, (L, D), jnp.float32, -bound, bound)
    wb_stack = jax.random.uniform(kwb, (L, 1), jnp.float32, -bound, bound)
    # Module initializes self.b to zeros; small random values exercise the
    # additive-bias path (still deterministic).
    b_stack = 0.1 * jax.random.normal(kb, (L, D), dtype=jnp.float32)

    ref = cross_network_ref(x, w_stack, wb_stack, b_stack)

    # Default tiling: one partial block (TB=24 rows covering B=20).
    out = jax.block_until_ready(cross_network(x, w_stack, wb_stack, b_stack))
    np.testing.assert_allclose(np.asarray(out), np.asarray(ref), rtol=1e-4, atol=1e-4)

    # Multi-tile path with a partial last block (grid=3, last tile has 4 valid rows).
    out_tiled = jax.block_until_ready(
        cross_network(x, w_stack, wb_stack, b_stack, batch_tile=8))
    np.testing.assert_allclose(np.asarray(out_tiled), np.asarray(ref), rtol=1e-4, atol=1e-4)

    print("KERNEL_OK")
</pallas_src>

<mosaic_0001>
module attributes {stable_mosaic.version = 11 : i64} {
  func.func @cross_network_kernel(%arg0: i32, %arg1: memref<24x32xf32, #tpu.memory_space<vmem>>, %arg2: memref<32x3xf32, #tpu.memory_space<vmem>>, %arg3: memref<3xf32, #tpu.memory_space<smem>>, %arg4: memref<1x32xf32, #tpu.memory_space<vmem>>, %arg5: memref<24x32xf32, #tpu.memory_space<vmem>>) attributes {dimension_semantics = [#tpu.dimension_semantics<parallel>], iteration_bounds = array<i64: 1>, scalar_prefetch = 0 : i64, scratch_operands = 0 : i64, tpu.core_type = #tpu.core_type<tc>, window_params = [{transform_indices = @transform_0, window_bounds = array<i64: 24, 32>}, {pipeline_mode = #tpu.pipeline_mode<synchronous>, transform_indices = @transform_1, window_bounds = array<i64: 32, 3>}, {transform_indices = @transform_2, window_bounds = array<i64: 3>}, {pipeline_mode = #tpu.pipeline_mode<synchronous>, transform_indices = @transform_3, window_bounds = array<i64: 1, 32>}, {transform_indices = @transform_4, window_bounds = array<i64: 24, 32>}]} {
    %c0 = arith.constant 0 : index
    %c0_0 = arith.constant 0 : index
    %0 = vector.load %arg1[%c0, %c0_0] : memref<24x32xf32, #tpu.memory_space<vmem>>, vector<24x32xf32>
    %c0_1 = arith.constant 0 : index
    %c0_2 = arith.constant 0 : index
    %1 = vector.load %arg2[%c0_1, %c0_2] : memref<32x3xf32, #tpu.memory_space<vmem>>, vector<32x3xf32>
    %cst = arith.constant dense<0.000000e+00> : vector<24x3xf32>
    %2 = tpu.matmul %0, %1, %cst {dimension_numbers = #tpu.dot_dimension_numbers<[1], [0], [0], [1], [0, 0, 1, 1], [], []>} : vector<24x32xf32>, vector<32x3xf32>, vector<24x3xf32> -> vector<24x3xf32>
    %cst_3 = arith.constant 1.000000e+00 : f32
    %3 = vector.broadcast %cst_3 : f32 to vector<24x1xf32>
    %4 = vector.extract_strided_slice %2 {offsets = [0, 0], sizes = [24, 1], strides = [1, 1]} : vector<24x3xf32> to vector<24x1xf32>
    %cst_4 = arith.constant 1.000000e+00 : f32
    %5 = vector.broadcast %cst_4 : f32 to vector<24x1xf32>
    %6 = arith.addf %5, %4 : vector<24x1xf32>
    %7 = arith.mulf %3, %6 : vector<24x1xf32>
    %c0_5 = arith.constant 0 : index
    %8 = memref.load %arg3[%c0_5] : memref<3xf32, #tpu.memory_space<smem>>
    %9 = vector.broadcast %8 : f32 to vector<24x1xf32>
    %10 = arith.addf %7, %9 : vector<24x1xf32>
    %11 = vector.extract_strided_slice %2 {offsets = [0, 1], sizes = [24, 1], strides = [1, 1]} : vector<24x3xf32> to vector<24x1xf32>
    %cst_6 = arith.constant 1.000000e+00 : f32
    %12 = vector.broadcast %cst_6 : f32 to vector<24x1xf32>
    %13 = arith.addf %12, %11 : vector<24x1xf32>
    %14 = arith.mulf %10, %13 : vector<24x1xf32>
    %c1 = arith.constant 1 : index
    %15 = memref.load %arg3[%c1] : memref<3xf32, #tpu.memory_space<smem>>
    %16 = vector.broadcast %15 : f32 to vector<24x1xf32>
    %17 = arith.addf %14, %16 : vector<24x1xf32>
    %18 = vector.extract_strided_slice %2 {offsets = [0, 2], sizes = [24, 1], strides = [1, 1]} : vector<24x3xf32> to vector<24x1xf32>
    %cst_7 = arith.constant 1.000000e+00 : f32
    %19 = vector.broadcast %cst_7 : f32 to vector<24x1xf32>
    %20 = arith.addf %19, %18 : vector<24x1xf32>
    %21 = arith.mulf %17, %20 : vector<24x1xf32>
    %c2 = arith.constant 2 : index
    %22 = memref.load %arg3[%c2] : memref<3xf32, #tpu.memory_space<smem>>
    %23 = vector.broadcast %22 : f32 to vector<24x1xf32>
    %24 = arith.addf %21, %23 : vector<24x1xf32>
    %c0_8 = arith.constant 0 : index
    %c0_9 = arith.constant 0 : index
    %25 = vector.load %arg1[%c0_8, %c0_9] : memref<24x32xf32, #tpu.memory_space<vmem>>, vector<24x32xf32>
    %26 = vector.broadcast %24 : vector<24x1xf32> to vector<24x32xf32>
    %27 = arith.mulf %25, %26 : vector<24x32xf32>
    %c0_10 = arith.constant 0 : index
    %c0_11 = arith.constant 0 : index
    %28 = vector.load %arg4[%c0_10, %c0_11] : memref<1x32xf32, #tpu.memory_space<vmem>>, vector<1x32xf32>
    %29 = vector.broadcast %28 : vector<1x32xf32> to vector<24x32xf32>
    %30 = arith.addf %27, %29 : vector<24x32xf32>
    %c0_12 = arith.constant 0 : index
    %c0_13 = arith.constant 0 : index
    %31 = vector.load %arg5[%c0_12, %c0_13] : memref<24x32xf32, #tpu.memory_space<vmem>>, vector<24x32xf32>
    tpu.vector_store %arg5[%c0_12, %c0_13], %30 {strides = array<i32>} : memref<24x32xf32, #tpu.memory_space<vmem>>, vector<24x32xf32>,
    return
  }
  func.func @transform_0(%arg0: i32) -> (i32, i32) {
    %c0_i32 = arith.constant 0 : i32
    %c0_i32_0 = arith.constant 0 : i32
    return %arg0, %c0_i32 : i32, i32
  }
  func.func @transform_1(%arg0: i32) -> (i32, i32) {
    %c0_i32 = arith.constant 0 : i32
    %c0_i32_0 = arith.constant 0 : i32
    %c0_i32_1 = arith.constant 0 : i32
    return %c0_i32, %c0_i32_0 : i32, i32
  }
  func.func @transform_2(%arg0: i32) -> i32 {
    %c0_i32 = arith.constant 0 : i32
    %c0_i32_0 = arith.constant 0 : i32
    return %c0_i32 : i32
  }
  func.func @transform_3(%arg0: i32) -> (i32, i32) {
    %c0_i32 = arith.constant 0 : i32
    %c0_i32_0 = arith.constant 0 : i32
    %c0_i32_1 = arith.constant 0 : i32
    return %c0_i32, %c0_i32_0 : i32, i32
  }
  func.func @transform_4(%arg0: i32) -> (i32, i32) {
    %c0_i32 = arith.constant 0 : i32
    %c0_i32_0 = arith.constant 0 : i32
    return %arg0, %c0_i32 : i32, i32
  }
}

</mosaic_0001>

<llo_original>
// kernel: tpu_custom_call.1
$region0: #{tpu_custom_call.1}
  #allocation0 [shape = 'u32[]', space=smem, size = 0x4, offset = 0x4, fixed_abs, tag = 'smem constant byte address 0x4 - core index']
  #allocation1 [shape = 'u32[144,128]{1,0:T(1,128)}', space=vmem, size = 0x12000, scoped, tag = 'internal scratch']
  %s0 = inlined_call_operand.vmem [shape: f32[20,32], index: 0, kind: input, shape index: {}]
  %s1 = inlined_call_operand.vmem [shape: f32[32,3], index: 1, kind: input, shape index: {}]
  %s2 = inlined_call_operand.vmem [shape: f32[3], index: 2, kind: input, shape index: {}]
  %s3 = inlined_call_operand.vmem [shape: f32[1,32], index: 3, kind: input, shape index: {}]
  %s4 = inlined_call_operand.hbm [shape: f32[20,32], index: 4, kind: output, shape index: {}]
  %s5 = sld [smem:[#allocation0]]
  $region30: #{tpu_custom_call.1} parent=0
    _
  %s7 = ssub.s32 1, %s5
  %s8 = scalar_select 0, %s7, %s5
  $region1: #{tpu_custom_call.1} parent=0
    #allocation2 [shape = 'u8[512]{0}', space=smem, size = 0x200, scoped, tag = 'input window, operand 2, single buffered']
    #allocation3 [shape = 's32[1]{0}', space=sflag, size = 0x4, scoped, tag = 'scoped memory for tpu_custom_call.1']
    #allocation4 [shape = 's32[1]{0}', space=sflag, size = 0x4, scoped, tag = 'scoped memory for tpu_custom_call.1']
    #allocation5 [shape = 'u8[12288]{0}', space=vmem, size = 0x3000, scoped, tag = 'output window, operand 0, single buffered']
    %9 = vsyncpa [#allocation4], 0
    %10 = vsyncpa [#allocation3], 0
    // Predicated region
    $region2: #{tpu_custom_call.1} parent=1 // pred_check
      _
    $region3: #{tpu_custom_call.1} parent=1 // pred_check_branch
      %12 = sbr.rel (0) target = $region5
    $region4: #{tpu_custom_call.1} parent=1 // pred_region
      _
    $region5: #{tpu_custom_call.1} parent=1 // pred_fallthru
      _
    // Predicated region
    $region6: #{tpu_custom_call.1} parent=1 // pred_check
      _
    $region7: #{tpu_custom_call.1} parent=1 // pred_check_branch
      %14 = sbr.rel (0) target = $region9
    $region8: #{tpu_custom_call.1} parent=1 // pred_region
      _
    $region9: #{tpu_custom_call.1} parent=1 // pred_fallthru
      _
    // Predicated region
    $region10: #{tpu_custom_call.1} parent=1 // pred_check
      _
    $region11: #{tpu_custom_call.1} parent=1 // pred_check_branch
      %16 = sbr.rel (0) target = $region13
    $region12: #{tpu_custom_call.1} parent=1 // pred_region
      %s18 = ssub.s32 16, 16
      %19 = vsyncadd [#allocation4], %s18
      %s21 = sshll.u32 %s2, 4
      %s22 = int_to_ptr.vmem [resolvable:$true] %s21
      %24 = dma.vmem_to_smem %s22, 16, [#allocation2], [#allocation4]
    $region13: #{tpu_custom_call.1} parent=1 // pred_fallthru
      _
    // Predicated region
    $region14: #{tpu_custom_call.1} parent=1 // pred_check
      _
    $region15: #{tpu_custom_call.1} parent=1 // pred_check_branch
      %26 = sbr.rel (0) target = $region17
    $region16: #{tpu_custom_call.1} parent=1 // pred_region
      _
    $region17: #{tpu_custom_call.1} parent=1 // pred_fallthru
      _
    // Predicated region
    $region18: #{tpu_custom_call.1} parent=1 // pred_check
      _
    $region19: #{tpu_custom_call.1} parent=1 // pred_check_branch
      %28 = sbr.rel (0) target = $region21
    $region20: #{tpu_custom_call.1} parent=1 // pred_region
      %29 = dma.done [#allocation4], 16
    $region21: #{tpu_custom_call.1} parent=1 // pred_fallthru
      _
    %30 = sfence
    %v31 = vld [vmem:[%s0] sm:$0xff]
    %v32 = vld [vmem:[%s0 + $0x8] sm:$0xff]
    %v33 = vld [vmem:[%s0 + $0x10] sm:$0xff]
    %v34 = vld [vmem:[%s1] sm:$0xff]
    %v35 = vld [vmem:[%s1 + $0x8] sm:$0xff]
    %v36 = vld [vmem:[%s1 + $0x10] sm:$0xff]
    %v37 = vld [vmem:[%s1 + $0x18] sm:$0xff]
    %vm38 = vcmask 261120
    %v40 = vsel %vm38, %v31, 0
    %v43 = vsel %vm38, %v32, 0
    %v46 = vsel %vm38, %v33, 0
    %48 = vmatprep.subr.mxu0 0.0
    %49 = vmatpush1.msra.mxu0 %v34
    %50 = vmatprep.subr.mxu0 0.0
    %51 = vmatpush1.msra.mxu0 %v35
    %52 = vmatprep.subr.mxu0 0.0
    %53 = vmatpush1.msra.mxu0 %v36
    %54 = vmatprep.subr.mxu0 0.0
    %55 = vmatpush1.msra.mxu0 %v37
    %56 = vmatprep.subr.mxu0 0.0
    %57 = vmatpush1.msra.mxu0 0.0
    %58 = vmatprep.subr.mxu0 0.0
    %59 = vmatpush1.msra.mxu0 0.0
    %60 = vmatprep.subr.mxu0 0.0
    %61 = vmatpush1.msra.mxu0 0.0
    %62 = vmatprep.subr.mxu0 0.0
    %63 = vmatpush1.msra.mxu0 0.0
    %64 = vmatprep.subr.mxu0 0.0
    %65 = vmatpush1.msra.mxu0 0.0
    %66 = vmatprep.subr.mxu0 0.0
    %67 = vmatpush1.msra.mxu0 0.0
    %68 = vmatprep.subr.mxu0 0.0
    %69 = vmatpush1.msra.mxu0 0.0
    %70 = vmatprep.subr.mxu0 0.0
    %71 = vmatpush1.msra.mxu0 0.0
    %72 = vmatprep.subr.mxu0 0.0
    %73 = vmatpush1.msra.mxu0 0.0
    %74 = vmatprep.subr.mxu0 0.0
    %75 = vmatpush1.msra.mxu0 0.0
    %76 = vmatprep.subr.mxu0 0.0
    %77 = vmatpush1.msra.mxu0 0.0
    %78 = vmatprep.subr.mxu0 0.0
    %79 = vmatpush1.msra.mxu0 0.0
    %80 = vmatprep.subr.mxu0 0.0
    %81 = vmatpush1.msra.mxu0 0.0
    %82 = vmatprep.subr.mxu0 0.0
    %83 = vmatpush1.msra.mxu0 0.0
    %84 = vmatprep.subr.mxu0 0.0
    %85 = vmatpush1.msra.mxu0 0.0
    %86 = vmatprep.subr.mxu0 0.0
    %87 = vmatpush1.msra.mxu0 0.0
    %88 = vmatprep.subr.mxu0 0.0
    %89 = vmatpush1.msra.mxu0 0.0
    %90 = vmatprep.subr.mxu0 0.0
    %91 = vmatpush1.msra.mxu0 0.0
    %92 = vmatprep.subr.mxu0 0.0
    %93 = vmatpush1.msra.mxu0 0.0
    %94 = vmatprep.subr.mxu0 0.0
    %95 = vmatpush1.msra.mxu0 0.0
    %96 = vmatprep.subr.mxu0 0.0
    %97 = vmatpush1.msra.mxu0 0.0
    %98 = vmatprep.subr.mxu0 0.0
    %99 = vmatpush1.msra.mxu0 0.0
    %100 = vmatprep.subr.mxu0 0.0
    %101 = vmatpush1.msra.mxu0 0.0
    %102 = vmatprep.subr.mxu0 0.0
    %103 = vmatpush1.msra.mxu0 0.0
    %104 = vmatprep.subr.mxu0 0.0
    %105 = vmatpush1.msra.mxu0 0.0
    %106 = vmatprep.subr.mxu0 0.0
    %107 = vmatpush1.msra.mxu0 0.0
    %108 = vmatprep.subr.mxu0 0.0
    %109 = vmatpush1.msra.mxu0 0.0
    %110 = vmatprep.subr.mxu0 0.0
    %111 = vmatpush1.msra.mxu0 0.0
    %112 = vmatprep.mubr.f32.mxu0 0.0
    %113 = vmatmul.mubr.f32.gmra.mrb[0].mxu0 %v40
    %v114 = vpop.f32.mrb[0].mxu0
    %v115 = vadd.f32 0.0, %v114
    %v116 = vpop.f32.mrb[0].mxu0
    %117 = vmatprep.mubr.f32.mxu0 0.0
    %118 = vmatmul.mubr.f32.gmra.mrb[0].mxu0 %v43
    %v119 = vpop.f32.mrb[0].mxu0
    %v120 = vadd.f32 0.0, %v119
    %v121 = vpop.f32.mrb[0].mxu0
    %122 = vmatprep.mubr.f32.mxu0 0.0
    %123 = vmatmul.mubr.f32.gmra.mrb[0].mxu0 %v46
    %v124 = vpop.f32.mrb[0].mxu0
    %v125 = vadd.f32 0.0, %v124
    %v126 = vpop.f32.mrb[0].mxu0
    %127 = vdwg.mxu0
    %v128 = vadd.f32 %v115, 1.0
    %v129 = vadd.f32 %v120, 1.0
    %v130 = vadd.f32 %v125, 1.0
    %s131 = sld [smem:[#allocation2]]
    %v132 = vstv %s131
    %v133 = vadd.f32 %v128, %v132
    %v134 = vadd.f32 %v129, %v132
    %v135 = vadd.f32 %v130, %v132
    %139 = vrot.lane.b32.xlu0 %v128, 127
    %v140 = vpop.permute.xlu0 %139
    %141 = vrot.lane.b32.xlu0 %v129, 127
    %v142 = vpop.permute.xlu0 %141
    %143 = vrot.lane.b32.xlu0 %v130, 127
    %v144 = vpop.permute.xlu0 %143
    %v148 = vmul.f32 %v133, %v140
    %v149 = vmul.f32 %v134, %v142
    %v150 = vmul.f32 %v135, %v144
    %s151 = sld [smem:[#allocation2 + $0x1]]
    %v152 = vstv %s151
    %v153 = vadd.f32 %v148, %v152
    %v154 = vadd.f32 %v149, %v152
    %v155 = vadd.f32 %v150, %v152
    %156 = vrot.lane.b32.xlu0 %v128, 126
    %v157 = vpop.permute.xlu0 %156
    %158 = vrot.lane.b32.xlu0 %v129, 126
    %v159 = vpop.permute.xlu0 %158
    %160 = vrot.lane.b32.xlu0 %v130, 126
    %v161 = vpop.permute.xlu0 %160
    %v165 = vmul.f32 %v153, %v157
    %v166 = vmul.f32 %v154, %v159
    %v167 = vmul.f32 %v155, %v161
    %s168 = sld [smem:[#allocation2 + $0x2]]
    %v169 = vstv %s168
    %v170 = vadd.f32 %v165, %v169
    %v171 = vadd.f32 %v166, %v169
    %v172 = vadd.f32 %v167, %v169
    %174 = vset.pattern.permute.xlu0 0
    %175 = vperm.xlu0 %174, %v170
    %v176 = vpop.permute.xlu0 %175
    %179 = vset.pattern.permute.xlu0 0
    %180 = vperm.xlu0 %179, %v171
    %v181 = vpop.permute.xlu0 %180
    %184 = vset.pattern.permute.xlu0 0
    %185 = vperm.xlu0 %184, %v172
    %v186 = vpop.permute.xlu0 %185
    %v188 = vmul.f32 %v31, %v176
    %v189 = vmul.f32 %v32, %v181
    %v190 = vmul.f32 %v33, %v186
    %v191 = vld [vmem:[%s3] sm:$0x1]
    %v193 = vlaneseq
    %v194 = vshrl.u32 %v193, 7
    %v195 = vsub.s32 0, %v194
    %v196 = vrot.slane %v191, %v195
    %v198 = vadd.f32 %v188, %v196
    %v199 = vadd.f32 %v189, %v196
    %v200 = vadd.f32 %v190, %v196
    %201 = vst.msk [vmem:[#allocation5] sm:$0xff] %vm38, %v198
    %202 = vst.msk [vmem:[#allocation5 + $0x8] sm:$0xff] %vm38, %v199
    %203 = vst.msk [vmem:[#allocation5 + $0x10] sm:$0xff] %vm38, %v200
    // Predicated region
    $region22: #{tpu_custom_call.1} parent=1 // pred_check
      _
    $region23: #{tpu_custom_call.1} parent=1 // pred_check_branch
      %205 = sbr.rel (0) target = $region25
    $region24: #{tpu_custom_call.1} parent=1 // pred_region
      %s207 = ssub.s32 384, 384
      %208 = vsyncadd [#allocation3], %s207
      %s209 = sshll.u32 [#allocation5], 4
      %s210 = int_to_ptr.vmem [resolvable:$true] %s209
      %215 = dma.vmem_to_hbm [thread:$0]  %s210, 384, %s4, [#allocation3], 128, 128, 8
    $region25: #{tpu_custom_call.1} parent=1 // pred_fallthru
      _
    // Predicated region
    $region26: #{tpu_custom_call.1} parent=1 // pred_check
      _
    $region27: #{tpu_custom_call.1} parent=1 // pred_check_branch
      %217 = sbr.rel (0) target = $region29
    $region28: #{tpu_custom_call.1} parent=1 // pred_region
      %218 = dma.done [#allocation3], 384
    $region29: #{tpu_custom_call.1} parent=1 // pred_fallthru
      _
    %219 = vsyncpa [#allocation3], 1
    %220 = vsyncpa [#allocation4], 1

</llo_original>
